<compile_context>
chip_gen: v6e
topology: v6e:2x2x1
jax: 0.10.0
libtpu: 0.0.40
codegen_flags: <defaults>
</compile_context>

<pallas_src>
import functools

import jax
import jax.numpy as jnp
from jax.experimental import pallas as pl
from jax.experimental.pallas import tpu as pltpu


def _self_attn_kernel(x_ref, xt_ref, w_ref, mask_ref, gamma_ref, o_ref):
    """Whole-problem kernel over one folded (C+1, B*N) slab (no grid).

    x_ref    : (C+1, BN) augmented input [x ; 1], f32 (residual needs f32)
    xt_ref   : (BN, C+1) augmented input transposed (f32 or bf16)
    w_ref    : (2C+1, C+1) stacked [wv_aug ; M3] (f32 or bf16)
    mask_ref : (BN, BN) block-diagonal batch mask, f32
    gamma_ref: (1, 1) SMEM scalar
    o_ref    : (C, BN)
    """
    c = o_ref.shape[0]
    dt = w_ref.dtype                     # f32, or bf16 on the v6e/v7x MXU path
    x_aug = x_ref[...]                   # (C+1, BN) f32

    # One stacked MXU dot for both channel projections (value proj + M3).
    yv = jnp.dot(w_ref[...], x_aug.astype(dt),
                 preferred_element_type=jnp.float32)           # (2C+1, BN) f32
    v = yv[:c, :]                        # (C,   BN) = Wv x + bv   (vreg-aligned)
    y = yv[c:, :]                        # (C+1, BN) = M3 @ [x;1]  (sublane-aligned)

    # Fused score s[j, i] = k_j^T q_i; all bias terms absorbed by augmentation.
    s = jnp.dot(xt_ref[...], y.astype(dt),
                preferred_element_type=jnp.float32)            # (BN, BN) f32

    # sigmoid on the EUP: sigmoid(s) == 0.5 * tanh(s / 2) + 0.5 (exact identity).
    attn = 0.5 * jnp.tanh(0.5 * s) + 0.5

    # Per-batch attention for the folded lane axis: single VPU multiply with
    # the precomputed block-diagonal mask (replaces iota/div/compare/where).
    attn = attn * mask_ref[...]

    # out[c, i] = sum_j v[c, j] * sigmoid(s)[j, i]
    out = jnp.dot(v.astype(dt), attn.astype(dt),
                  preferred_element_type=jnp.float32)          # (C, BN) f32

    # Residual + gamma scale in f32; single lane-dense (C, 128) store.
    o_ref[...] = (gamma_ref[0, 0] * out + x_aug[:c, :]).astype(o_ref.dtype)


@functools.partial(jax.jit, static_argnames=("mxu_bf16",))
def self_attn_forward(x, wq, bq, wk, bk, wv, bv, gamma, *, mxu_bf16=False):
    """x: (B, C, H, W) float32.  Returns (B, C, H, W).  mode='hw'."""
    B, C, H, W = x.shape
    N = H * W
    BN = B * N

    # Fold batch into the spatial/lane axis and augment with a ones row so all
    # biases ride inside the matmuls: x_aug = [x ; 1] of shape (C+1, B*N).
    x_fold = jnp.transpose(x.reshape(B, C, N), (1, 0, 2)).reshape(C, BN)
    x_fold = x_fold.astype(jnp.float32)
    x_aug = jnp.concatenate([x_fold, jnp.ones((1, BN), jnp.float32)], axis=0)
    xt_aug = x_aug.T                                            # (BN, C+1)

    # Augmented fused-score matrix: [x;1]^T M3 [x;1] == (Wk x + bk)^T (Wq x + bq).
    m3 = jnp.block([[wk.T @ wq, wk.T @ bq],
                    [bk.T @ wq, bk.T @ bq]])                    # (C+1, C+1)
    wv_aug = jnp.concatenate([wv, bv], axis=1)                  # (C,   C+1)
    # wv_aug first so both row-slices of the stacked result are sublane-aligned.
    w_stack = jnp.concatenate([wv_aug, m3], axis=0)             # (2C+1, C+1)

    # Block-diagonal batch mask, built once in the wrapper (not in the kernel).
    ids = jnp.arange(BN, dtype=jnp.int32) // N
    mask = (ids[:, None] == ids[None, :]).astype(jnp.float32)   # (BN, BN)

    gamma2 = jnp.reshape(gamma, (1, 1)).astype(jnp.float32)

    if mxu_bf16:
        # v6e/v7x MXU-operand cast (f32 accumulation). Loosen the reference
        # tolerance if enabling this path.
        xt_aug = xt_aug.astype(jnp.bfloat16)
        w_stack = w_stack.astype(jnp.bfloat16)

    flops = (2 * (2 * C + 1) * (C + 1) * BN          # stacked channel matmul
             + 2 * BN * (C + 1) * BN                 # fused score
             + 2 * C * BN * BN)                      # PV contraction
    bytes_accessed = 4 * ((C + 1) * BN + BN * (C + 1) + (2 * C + 1) * (C + 1)
                          + BN * BN + 1 + C * BN)
    cost = pl.CostEstimate(flops=flops, transcendentals=BN * BN,
                           bytes_accessed=bytes_accessed)

    vmem = pltpu.MemorySpace.VMEM
    smem = pltpu.MemorySpace.SMEM
    out_fold = pl.pallas_call(
        _self_attn_kernel,
        out_shape=jax.ShapeDtypeStruct((C, BN), x.dtype),
        in_specs=[
            pl.BlockSpec(memory_space=vmem),   # x_aug   (C+1, BN)
            pl.BlockSpec(memory_space=vmem),   # xt_aug  (BN, C+1)
            pl.BlockSpec(memory_space=vmem),   # w_stack (2C+1, C+1)
            pl.BlockSpec(memory_space=vmem),   # mask    (BN, BN)
            pl.BlockSpec(memory_space=smem),   # gamma   (1, 1) scalar
        ],
        out_specs=pl.BlockSpec(memory_space=vmem),
        cost_estimate=cost,
    )(x_aug, xt_aug, w_stack, mask, gamma2)

    out = jnp.transpose(out_fold.reshape(C, B, N), (1, 0, 2))
    return out.reshape(B, C, H, W)


def reference_forward(x, wq, bq, wk, bk, wv, bv, gamma):
    """Direct transcription of the PyTorch module (f32)."""
    B, C, H, W = x.shape
    N = H * W
    xf = x.reshape(B, C, N).astype(jnp.float32)
    q = jnp.einsum('qc,bcn->bqn', wq, xf) + bq[None]          # (B, Cq, N)
    k = jnp.einsum('qc,bcn->bqn', wk, xf) + bk[None]          # (B, Cq, N)
    v = jnp.einsum('vc,bcn->bvn', wv, xf) + bv[None]          # (B, C,  N)
    attn = jax.nn.sigmoid(jnp.einsum('bci,bcj->bij', q, k))   # (B, N, N)
    out = jnp.einsum('bcj,bij->bci', v, attn)                 # (B, C, N)
    out = gamma.reshape(()) * out + xf
    return out.reshape(B, C, H, W).astype(x.dtype)


if __name__ == "__main__":
    key = jax.random.PRNGKey(0)
    B, C, H, W = 2, 16, 8, 8          # N = 64, B*N = 128 -> lane-dense
    Cq = C // 8

    keys = jax.random.split(key, 8)
    x = jax.random.normal(keys[0], (B, C, H, W), jnp.float32)
    wq = jax.random.normal(keys[1], (Cq, C), jnp.float32) * 0.1
    bq = jax.random.normal(keys[2], (Cq, 1), jnp.float32) * 0.1
    wk = jax.random.normal(keys[3], (Cq, C), jnp.float32) * 0.1
    bk = jax.random.normal(keys[4], (Cq, 1), jnp.float32) * 0.1
    wv = jax.random.normal(keys[5], (C, C), jnp.float32) * 0.1
    bv = jax.random.normal(keys[6], (C, 1), jnp.float32) * 0.1
    # PyTorch inits gamma to 0 (making out == x); use a nonzero deterministic
    # value here so the attention path is actually exercised / checked.
    gamma = jnp.array([[0.5]], dtype=jnp.float32)

    out = self_attn_forward(x, wq, bq, wk, bk, wv, bv, gamma)
    jax.block_until_ready(out)

    ref = reference_forward(x, wq, bq, wk, bk, wv, bv, gamma)
    assert out.shape == (B, C, H, W)
    assert jnp.allclose(out, ref, rtol=1e-4, atol=1e-4), "mismatch vs reference"

    print("KERNEL_OK")
</pallas_src>

<mosaic_0001>
module attributes {stable_mosaic.version = 11 : i64} {
  func.func @_self_attn_kernel(%arg0: memref<17x128xf32, #tpu.memory_space<vmem>>, %arg1: memref<128x17xf32, #tpu.memory_space<vmem>>, %arg2: memref<33x17xf32, #tpu.memory_space<vmem>>, %arg3: memref<128x128xf32, #tpu.memory_space<vmem>>, %arg4: memref<1x1xf32, #tpu.memory_space<smem>>, %arg5: memref<16x128xf32, #tpu.memory_space<vmem>>) attributes {dimension_semantics = [], scalar_prefetch = 0 : i64, scratch_operands = 0 : i64, tpu.core_type = #tpu.core_type<tc>} {
    %c0 = arith.constant 0 : index
    %c0_0 = arith.constant 0 : index
    %0 = vector.load %arg0[%c0, %c0_0] : memref<17x128xf32, #tpu.memory_space<vmem>>, vector<17x128xf32>
    %c0_1 = arith.constant 0 : index
    %c0_2 = arith.constant 0 : index
    %1 = vector.load %arg2[%c0_1, %c0_2] : memref<33x17xf32, #tpu.memory_space<vmem>>, vector<33x17xf32>
    %cst = arith.constant dense<0.000000e+00> : vector<33x128xf32>
    %2 = tpu.matmul %1, %0, %cst {dimension_numbers = #tpu.dot_dimension_numbers<[1], [0], [0], [1], [0, 0, 1, 1], [], []>} : vector<33x17xf32>, vector<17x128xf32>, vector<33x128xf32> -> vector<33x128xf32>
    %3 = vector.extract_strided_slice %2 {offsets = [0, 0], sizes = [16, 128], strides = [1, 1]} : vector<33x128xf32> to vector<16x128xf32>
    %4 = vector.extract_strided_slice %2 {offsets = [16, 0], sizes = [17, 128], strides = [1, 1]} : vector<33x128xf32> to vector<17x128xf32>
    %c0_3 = arith.constant 0 : index
    %c0_4 = arith.constant 0 : index
    %5 = vector.load %arg1[%c0_3, %c0_4] : memref<128x17xf32, #tpu.memory_space<vmem>>, vector<128x17xf32>
    %cst_5 = arith.constant dense<0.000000e+00> : vector<128x128xf32>
    %6 = tpu.matmul %5, %4, %cst_5 {dimension_numbers = #tpu.dot_dimension_numbers<[1], [0], [0], [1], [0, 0, 1, 1], [], []>} : vector<128x17xf32>, vector<17x128xf32>, vector<128x128xf32> -> vector<128x128xf32>
    %cst_6 = arith.constant 5.000000e-01 : f32
    %7 = vector.broadcast %cst_6 : f32 to vector<128x128xf32>
    %8 = arith.mulf %7, %6 : vector<128x128xf32>
    %9 = math.tanh %8 : vector<128x128xf32>
    %cst_7 = arith.constant 5.000000e-01 : f32
    %10 = vector.broadcast %cst_7 : f32 to vector<128x128xf32>
    %11 = arith.mulf %10, %9 : vector<128x128xf32>
    %cst_8 = arith.constant 5.000000e-01 : f32
    %12 = vector.broadcast %cst_8 : f32 to vector<128x128xf32>
    %13 = arith.addf %11, %12 : vector<128x128xf32>
    %c0_9 = arith.constant 0 : index
    %c0_10 = arith.constant 0 : index
    %14 = vector.load %arg3[%c0_9, %c0_10] : memref<128x128xf32, #tpu.memory_space<vmem>>, vector<128x128xf32>
    %15 = arith.mulf %13, %14 : vector<128x128xf32>
    %cst_11 = arith.constant dense<0.000000e+00> : vector<16x128xf32>
    %16 = tpu.matmul %3, %15, %cst_11 {dimension_numbers = #tpu.dot_dimension_numbers<[1], [0], [0], [1], [0, 0, 1, 1], [], []>} : vector<16x128xf32>, vector<128x128xf32>, vector<16x128xf32> -> vector<16x128xf32>
    %c0_12 = arith.constant 0 : index
    %c0_13 = arith.constant 0 : index
    %17 = memref.load %arg4[%c0_12, %c0_13] : memref<1x1xf32, #tpu.memory_space<smem>>
    %18 = vector.broadcast %17 : f32 to vector<16x128xf32>
    %19 = arith.mulf %18, %16 : vector<16x128xf32>
    %20 = vector.extract_strided_slice %0 {offsets = [0, 0], sizes = [16, 128], strides = [1, 1]} : vector<17x128xf32> to vector<16x128xf32>
    %21 = arith.addf %19, %20 : vector<16x128xf32>
    %c0_14 = arith.constant 0 : index
    %c0_15 = arith.constant 0 : index
    %22 = vector.load %arg5[%c0_14, %c0_15] : memref<16x128xf32, #tpu.memory_space<vmem>>, vector<16x128xf32>
    tpu.vector_store %arg5[%c0_14, %c0_15], %21 {strides = array<i32>} : memref<16x128xf32, #tpu.memory_space<vmem>>, vector<16x128xf32>,
    return
  }
}

</mosaic_0001>

<llo_original>
// kernel: self_attn_forward.1
$region0: #{self_attn_forward.1}
  #allocation0 [shape = 'u32[]', space=smem, size = 0x4, offset = 0x4, fixed_abs, tag = 'smem constant byte address 0x4 - core index']
  #allocation1 [shape = 'u32[144,128]{1,0:T(1,128)}', space=vmem, size = 0x12000, scoped, tag = 'internal scratch']
  #allocation2 [shape = 'f32[1,1]{1,0:T(1,128)S(6)}', space=smem, size = 0x200, scoped, tag = 'scoped memory for self_attn_forward.1']
  %s0 = inlined_call_operand.vmem [shape: f32[17,128], index: 0, kind: input, shape index: {}]
  %s1 = inlined_call_operand.vmem [shape: f32[128,17], index: 1, kind: input, shape index: {}]
  %s2 = inlined_call_operand.vmem [shape: f32[33,17], index: 2, kind: input, shape index: {}]
  %s3 = inlined_call_operand.vmem [shape: f32[128,128], index: 3, kind: input, shape index: {}]
  %s4 = inlined_call_operand.<no memory space> [shape: f32[1,1], index: 4, kind: input, shape index: {}]
  %s5 = inlined_call_operand.vmem [shape: f32[16,128], index: 5, kind: output, shape index: {}]
  %s6 = sld [smem:[#allocation0]]
  $region30: #{self_attn_forward.1} parent=0
    _
  %s8 = ssub.s32 1, %s6
  %s9 = scalar_select 0, %s8, %s6
  %10 = sst [smem:[#allocation2]] %s4
  // Predicated region
  $region2: #{self_attn_forward.1} parent=0 // pred_check
    _
  $region3: #{self_attn_forward.1} parent=0 // pred_check_branch
    %12 = sbr.rel (0) target = $region5
  $region4: #{self_attn_forward.1} parent=0 // pred_region
    _
  $region5: #{self_attn_forward.1} parent=0 // pred_fallthru
    _
  // Predicated region
  $region6: #{self_attn_forward.1} parent=0 // pred_check
    _
  $region7: #{self_attn_forward.1} parent=0 // pred_check_branch
    %14 = sbr.rel (0) target = $region9
  $region8: #{self_attn_forward.1} parent=0 // pred_region
    _
  $region9: #{self_attn_forward.1} parent=0 // pred_fallthru
    _
  // Predicated region
  $region10: #{self_attn_forward.1} parent=0 // pred_check
    _
  $region11: #{self_attn_forward.1} parent=0 // pred_check_branch
    %16 = sbr.rel (0) target = $region13
  $region12: #{self_attn_forward.1} parent=0 // pred_region
    _
  $region13: #{self_attn_forward.1} parent=0 // pred_fallthru
    _
  // Predicated region
  $region14: #{self_attn_forward.1} parent=0 // pred_check
    _
  $region15: #{self_attn_forward.1} parent=0 // pred_check_branch
    %18 = sbr.rel (0) target = $region17
  $region16: #{self_attn_forward.1} parent=0 // pred_region
    _
  $region17: #{self_attn_forward.1} parent=0 // pred_fallthru
    _
  // Predicated region
  $region18: #{self_attn_forward.1} parent=0 // pred_check
    _
  $region19: #{self_attn_forward.1} parent=0 // pred_check_branch
    %20 = sbr.rel (0) target = $region21
  $region20: #{self_attn_forward.1} parent=0 // pred_region
    _
  $region21: #{self_attn_forward.1} parent=0 // pred_fallthru
    _
  %v21 = vld [vmem:[%s0] sm:$0xff]
  %v22 = vld [vmem:[%s0 + $0x8] sm:$0xff]
  %v23 = vld [vmem:[%s0 + $0x10] sm:$0x1]
  %v24 = vld [vmem:[%s2] sm:$0xff]
  %v25 = vld [vmem:[%s2 + $0x8] sm:$0xff]
  %v26 = vld [vmem:[%s2 + $0x10] sm:$0xff]
  %v27 = vld [vmem:[%s2 + $0x18] sm:$0xff]
  %v28 = vld [vmem:[%s2 + $0x20] sm:$0x1]
  %vm29 = vcmask 138240
  %v31 = vsel %vm29, %v24, 0
  %v34 = vsel %vm29, %v25, 0
  %v37 = vsel %vm29, %v26, 0
  %v40 = vsel %vm29, %v27, 0
  %v43 = vsel %vm29, %v28, 0
  %vm45 = vcmask 1040384
  %v47 = vsel %vm45, %v23, 0
  %49 = vmatprep.subr.mxu0 0.0
  %50 = vmatpush1.msra.mxu0 0.0
  %51 = vmatprep.subr.mxu0 0.0
  %52 = vmatpush1.msra.mxu0 0.0
  %53 = vmatprep.subr.mxu0 0.0
  %54 = vmatpush1.msra.mxu0 0.0
  %55 = vmatprep.subr.mxu0 0.0
  %56 = vmatpush1.msra.mxu0 0.0
  %57 = vmatprep.subr.mxu0 0.0
  %58 = vmatpush1.msra.mxu0 0.0
  %59 = vmatprep.subr.mxu0 0.0
  %60 = vmatpush1.msra.mxu0 0.0
  %61 = vmatprep.subr.mxu0 0.0
  %62 = vmatpush1.msra.mxu0 0.0
  %63 = vmatprep.subr.mxu0 0.0
  %64 = vmatpush1.msra.mxu0 0.0
  %65 = vmatprep.subr.mxu0 0.0
  %66 = vmatpush1.msra.mxu0 0.0
  %67 = vmatprep.subr.mxu0 0.0
  %68 = vmatpush1.msra.mxu0 0.0
  %69 = vmatprep.subr.mxu0 0.0
  %70 = vmatpush1.msra.mxu0 0.0
  %71 = vmatprep.subr.mxu0 0.0
  %72 = vmatpush1.msra.mxu0 0.0
  %73 = vmatprep.subr.mxu0 0.0
  %74 = vmatpush1.msra.mxu0 0.0
  %75 = vmatprep.subr.mxu0 0.0
  %76 = vmatpush1.msra.mxu0 %v47
  %77 = vmatprep.subr.mxu0 0.0
  %78 = vmatpush1.msra.mxu0 %v22
  %79 = vmatprep.subr.mxu0 0.0
  %80 = vmatpush1.msra.mxu0 %v21
  %81 = vmatprep.subr.mxu0 0.0
  %82 = vmatpush2.msra.mxu0 0.0
  %83 = vmatprep.subr.mxu0 0.0
  %84 = vmatpush2.msra.mxu0 0.0
  %85 = vmatprep.subr.mxu0 0.0
  %86 = vmatpush2.msra.mxu0 0.0
  %87 = vmatprep.subr.mxu0 0.0
  %88 = vmatpush2.msra.mxu0 0.0
  %89 = vmatprep.subr.mxu0 0.0
  %90 = vmatpush2.msra.mxu0 0.0
  %91 = vmatprep.subr.mxu0 0.0
  %92 = vmatpush2.msra.mxu0 0.0
  %93 = vmatprep.subr.mxu0 0.0
  %94 = vmatpush2.msra.mxu0 0.0
  %95 = vmatprep.subr.mxu0 0.0
  %96 = vmatpush2.msra.mxu0 0.0
  %97 = vmatprep.subr.mxu0 0.0
  %98 = vmatpush2.msra.mxu0 0.0
  %99 = vmatprep.subr.mxu0 0.0
  %100 = vmatpush2.msra.mxu0 0.0
  %101 = vmatprep.subr.mxu0 0.0
  %102 = vmatpush2.msra.mxu0 0.0
  %103 = vmatprep.subr.mxu0 0.0
  %104 = vmatpush2.msra.mxu0 0.0
  %105 = vmatprep.subr.mxu0 0.0
  %106 = vmatpush2.msra.mxu0 0.0
  %107 = vmatprep.subr.mxu0 0.0
  %108 = vmatpush2.msra.mxu0 0.0
  %109 = vmatprep.subr.mxu0 0.0
  %110 = vmatpush2.msra.mxu0 0.0
  %111 = vmatprep.subr.mxu0 0.0
  %112 = vmatpush2.msra.mxu0 0.0
  %113 = vmatprep.mubr.f32.mxu0 0.0
  %114 = vmatmul.mubr.f32.gmra.mxu0 %v31
  %v115 = vpop.f32.mrf.mxu0
  %v116 = vadd.f32 0.0, %v115
  %v117 = vpop.f32.mrf.mxu0
  %118 = vmatprep.mubr.f32.mxu0 0.0
  %119 = vmatmul.mubr.f32.gmra.mxu0 %v34
  %v120 = vpop.f32.mrf.mxu0
  %v121 = vadd.f32 0.0, %v120
  %v122 = vpop.f32.mrf.mxu0
  %123 = vmatprep.mubr.f32.mxu0 0.0
  %124 = vmatmul.mubr.f32.gmra.mxu0 %v37
  %v125 = vpop.f32.mrf.mxu0
  %v126 = vadd.f32 0.0, %v125
  %v127 = vpop.f32.mrf.mxu0
  %128 = vmatprep.mubr.f32.mxu0 0.0
  %129 = vmatmul.mubr.f32.gmra.mxu0 %v40
  %v130 = vpop.f32.mrf.mxu0
  %v131 = vadd.f32 0.0, %v130
  %v132 = vpop.f32.mrf.mxu0
  %133 = vmatprep.mubr.f32.mxu0 0.0
  %134 = vmatmul.mubr.f32.gmra.mxu0 %v43
  %v135 = vpop.f32.mrf.mxu0
  %v136 = vadd.f32 0.0, %v135
  %v137 = vpop.f32.mrf.mxu0
  %138 = vdwg.mxu0
  %v139 = vld [vmem:[%s1] sm:$0xff]
  %v140 = vld [vmem:[%s1 + $0x8] sm:$0xff]
  %v141 = vld [vmem:[%s1 + $0x10] sm:$0xff]
  %v142 = vld [vmem:[%s1 + $0x18] sm:$0xff]
  %v143 = vld [vmem:[%s1 + $0x20] sm:$0xff]
  %v144 = vld [vmem:[%s1 + $0x28] sm:$0xff]
  %v145 = vld [vmem:[%s1 + $0x30] sm:$0xff]
  %v146 = vld [vmem:[%s1 + $0x38] sm:$0xff]
  %v147 = vld [vmem:[%s1 + $0x40] sm:$0xff]
  %v148 = vld [vmem:[%s1 + $0x48] sm:$0xff]
  %v149 = vld [vmem:[%s1 + $0x50] sm:$0xff]
  %v150 = vld [vmem:[%s1 + $0x58] sm:$0xff]
  %v151 = vld [vmem:[%s1 + $0x60] sm:$0xff]
  %v152 = vld [vmem:[%s1 + $0x68] sm:$0xff]
  %v153 = vld [vmem:[%s1 + $0x70] sm:$0xff]
  %v154 = vld [vmem:[%s1 + $0x78] sm:$0xff]
  %v156 = vsel %vm29, %v139, 0
  %v159 = vsel %vm29, %v140, 0
  %v162 = vsel %vm29, %v141, 0
  %v165 = vsel %vm29, %v142, 0
  %v168 = vsel %vm29, %v143, 0
  %v171 = vsel %vm29, %v144, 0
  %v174 = vsel %vm29, %v145, 0
  %v177 = vsel %vm29, %v146, 0
  %v180 = vsel %vm29, %v147, 0
  %v183 = vsel %vm29, %v148, 0
  %v186 = vsel %vm29, %v149, 0
  %v189 = vsel %vm29, %v150, 0
  %v192 = vsel %vm29, %v151, 0
  %v195 = vsel %vm29, %v152, 0
  %v198 = vsel %vm29, %v153, 0
  %v201 = vsel %vm29, %v154, 0
  %v204 = vsel %vm45, %v136, 0
  %206 = vmatprep.subr.mxu0 0.0
  %207 = vmatpush1.msra.mxu0 0.0
  %208 = vmatprep.subr.mxu0 0.0
  %209 = vmatpush1.msra.mxu0 0.0
  %210 = vmatprep.subr.mxu0 0.0
  %211 = vmatpush1.msra.mxu0 0.0
  %212 = vmatprep.subr.mxu0 0.0
  %213 = vmatpush1.msra.mxu0 0.0
  %214 = vmatprep.subr.mxu0 0.0
  %215 = vmatpush1.msra.mxu0 0.0
  %216 = vmatprep.subr.mxu0 0.0
  %217 = vmatpush1.msra.mxu0 0.0
  %218 = vmatprep.subr.mxu0 0.0
  %219 = vmatpush1.msra.mxu0 0.0
  %220 = vmatprep.subr.mxu0 0.0
  %221 = vmatpush1.msra.mxu0 0.0
  %222 = vmatprep.subr.mxu0 0.0
  %223 = vmatpush1.msra.mxu0 0.0
  %224 = vmatprep.subr.mxu0 0.0
  %225 = vmatpush1.msra.mxu0 0.0
  %226 = vmatprep.subr.mxu0 0.0
  %227 = vmatpush1.msra.mxu0 0.0
  %228 = vmatprep.subr.mxu0 0.0
  %229 = vmatpush1.msra.mxu0 0.0
  %230 = vmatprep.subr.mxu0 0.0
  %231 = vmatpush1.msra.mxu0 0.0
  %232 = vmatprep.subr.mxu0 0.0
  %233 = vmatpush1.msra.mxu0 %v204
  %234 = vmatprep.subr.mxu0 0.0
  %235 = vmatpush1.msra.mxu0 %v131
  %236 = vmatprep.subr.mxu0 0.0
  %237 = vmatpush1.msra.mxu0 %v126
  %238 = vmatprep.subr.mxu0 0.0
  %239 = vmatpush2.msra.mxu0 0.0
  %240 = vmatprep.subr.mxu0 0.0
  %241 = vmatpush2.msra.mxu0 0.0
  %242 = vmatprep.subr.mxu0 0.0
  %243 = vmatpush2.msra.mxu0 0.0
  %244 = vmatprep.subr.mxu0 0.0
  %245 = vmatpush2.msra.mxu0 0.0
  %246 = vmatprep.subr.mxu0 0.0
  %247 = vmatpush2.msra.mxu0 0.0
  %248 = vmatprep.subr.mxu0 0.0
  %249 = vmatpush2.msra.mxu0 0.0
  %250 = vmatprep.subr.mxu0 0.0
  %251 = vmatpush2.msra.mxu0 0.0
  %252 = vmatprep.subr.mxu0 0.0
  %253 = vmatpush2.msra.mxu0 0.0
  %254 = vmatprep.subr.mxu0 0.0
  %255 = vmatpush2.msra.mxu0 0.0
  %256 = vmatprep.subr.mxu0 0.0
  %257 = vmatpush2.msra.mxu0 0.0
  %258 = vmatprep.subr.mxu0 0.0
  %259 = vmatpush2.msra.mxu0 0.0
  %260 = vmatprep.subr.mxu0 0.0
  %261 = vmatpush2.msra.mxu0 0.0
  %262 = vmatprep.subr.mxu0 0.0
  %263 = vmatpush2.msra.mxu0 0.0
  %264 = vmatprep.subr.mxu0 0.0
  %265 = vmatpush2.msra.mxu0 0.0
  %266 = vmatprep.subr.mxu0 0.0
  %267 = vmatpush2.msra.mxu0 0.0
  %268 = vmatprep.subr.mxu0 0.0
  %269 = vmatpush2.msra.mxu0 0.0
  %270 = vmatprep.mubr.f32.mxu0 0.0
  %271 = vmatmul.mubr.f32.gmra.mxu0 %v156
  %v272 = vpop.f32.mrf.mxu0
  %v273 = vadd.f32 0.0, %v272
  %v274 = vpop.f32.mrf.mxu0
  %275 = vmatprep.mubr.f32.mxu0 0.0
  %276 = vmatmul.mubr.f32.gmra.mxu0 %v159
  %v277 = vpop.f32.mrf.mxu0
  %v278 = vadd.f32 0.0, %v277
  %v279 = vpop.f32.mrf.mxu0
  %280 = vmatprep.mubr.f32.mxu0 0.0
  %281 = vmatmul.mubr.f32.gmra.mxu0 %v162
  %v282 = vpop.f32.mrf.mxu0
  %v283 = vadd.f32 0.0, %v282
  %v284 = vpop.f32.mrf.mxu0
  %285 = vmatprep.mubr.f32.mxu0 0.0
  %286 = vmatmul.mubr.f32.gmra.mxu0 %v165
  %v287 = vpop.f32.mrf.mxu0
  %v288 = vadd.f32 0.0, %v287
  %v289 = vpop.f32.mrf.mxu0
  %290 = vmatprep.mubr.f32.mxu0 0.0
  %291 = vmatmul.mubr.f32.gmra.mxu0 %v168
  %v292 = vpop.f32.mrf.mxu0
  %v293 = vadd.f32 0.0, %v292
  %v294 = vpop.f32.mrf.mxu0
  %295 = vmatprep.mubr.f32.mxu0 0.0
  %296 = vmatmul.mubr.f32.gmra.mxu0 %v171
  %v297 = vpop.f32.mrf.mxu0
  %v298 = vadd.f32 0.0, %v297
  %v299 = vpop.f32.mrf.mxu0
  %300 = vmatprep.mubr.f32.mxu0 0.0
  %301 = vmatmul.mubr.f32.gmra.mxu0 %v174
  %v302 = vpop.f32.mrf.mxu0
  %v303 = vadd.f32 0.0, %v302
  %v304 = vpop.f32.mrf.mxu0
  %305 = vmatprep.mubr.f32.mxu0 0.0
  %306 = vmatmul.mubr.f32.gmra.mxu0 %v177
  %v307 = vpop.f32.mrf.mxu0
  %v308 = vadd.f32 0.0, %v307
  %v309 = vpop.f32.mrf.mxu0
  %310 = vmatprep.mubr.f32.mxu0 0.0
  %311 = vmatmul.mubr.f32.gmra.mxu0 %v180
  %v312 = vpop.f32.mrf.mxu0
  %v313 = vadd.f32 0.0, %v312
  %v314 = vpop.f32.mrf.mxu0
  %315 = vmatprep.mubr.f32.mxu0 0.0
  %316 = vmatmul.mubr.f32.gmra.mxu0 %v183
  %v317 = vpop.f32.mrf.mxu0
  %v318 = vadd.f32 0.0, %v317
  %v319 = vpop.f32.mrf.mxu0
  %320 = vmatprep.mubr.f32.mxu0 0.0
  %321 = vmatmul.mubr.f32.gmra.mxu0 %v186
  %v322 = vpop.f32.mrf.mxu0
  %v323 = vadd.f32 0.0, %v322
  %v324 = vpop.f32.mrf.mxu0
  %325 = vmatprep.mubr.f32.mxu0 0.0
  %326 = vmatmul.mubr.f32.gmra.mxu0 %v189
  %v327 = vpop.f32.mrf.mxu0
  %v328 = vadd.f32 0.0, %v327
  %v329 = vpop.f32.mrf.mxu0
  %330 = vmatprep.mubr.f32.mxu0 0.0
  %331 = vmatmul.mubr.f32.gmra.mxu0 %v192
  %v332 = vpop.f32.mrf.mxu0
  %v333 = vadd.f32 0.0, %v332
  %v334 = vpop.f32.mrf.mxu0
  %335 = vmatprep.mubr.f32.mxu0 0.0
  %336 = vmatmul.mubr.f32.gmra.mxu0 %v195
  %v337 = vpop.f32.mrf.mxu0
  %v338 = vadd.f32 0.0, %v337
  %v339 = vpop.f32.mrf.mxu0
  %340 = vmatprep.mubr.f32.mxu0 0.0
  %341 = vmatmul.mubr.f32.gmra.mxu0 %v198
  %v342 = vpop.f32.mrf.mxu0
  %v343 = vadd.f32 0.0, %v342
  %v344 = vpop.f32.mrf.mxu0
  %345 = vmatprep.mubr.f32.mxu0 0.0
  %346 = vmatmul.mubr.f32.gmra.mxu0 %v201
  %v347 = vpop.f32.mrf.mxu0
  %v348 = vadd.f32 0.0, %v347
  %v349 = vpop.f32.mrf.mxu0
  %350 = vdwg.mxu0
  %v351 = vmul.f32 %v273, 0.5
  %v352 = vmul.f32 %v278, 0.5
  %v353 = vmul.f32 %v283, 0.5
  %v354 = vmul.f32 %v288, 0.5
  %v355 = vmul.f32 %v293, 0.5
  %v356 = vmul.f32 %v298, 0.5
  %v357 = vmul.f32 %v303, 0.5
  %v358 = vmul.f32 %v308, 0.5
  %v359 = vmul.f32 %v313, 0.5
  %v360 = vmul.f32 %v318, 0.5
  %v361 = vmul.f32 %v323, 0.5
  %v362 = vmul.f32 %v328, 0.5
  %v363 = vmul.f32 %v333, 0.5
  %v364 = vmul.f32 %v338, 0.5
  %v365 = vmul.f32 %v343, 0.5
  %v366 = vmul.f32 %v348, 0.5
  %v367 = vtanh.pop %v351
  %v368 = vtanh.pop %v352
  %v369 = vtanh.pop %v353
  %v370 = vtanh.pop %v354
  %v371 = vtanh.pop %v355
  %v372 = vtanh.pop %v356
  %v373 = vtanh.pop %v357
  %v374 = vtanh.pop %v358
  %v375 = vtanh.pop %v359
  %v376 = vtanh.pop %v360
  %v377 = vtanh.pop %v361
  %v378 = vtanh.pop %v362
  %v379 = vtanh.pop %v363
  %v380 = vtanh.pop %v364
  %v381 = vtanh.pop %v365
  %v382 = vtanh.pop %v366
  %v383 = vmul.f32 %v367, 0.5
  %v384 = vmul.f32 %v368, 0.5
  %v385 = vmul.f32 %v369, 0.5
  %v386 = vmul.f32 %v370, 0.5
  %v387 = vmul.f32 %v371, 0.5
  %v388 = vmul.f32 %v372, 0.5
  %v389 = vmul.f32 %v373, 0.5
  %v390 = vmul.f32 %v374, 0.5
  %v391 = vmul.f32 %v375, 0.5
  %v392 = vmul.f32 %v376, 0.5
  %v393 = vmul.f32 %v377, 0.5
  %v394 = vmul.f32 %v378, 0.5
  %v395 = vmul.f32 %v379, 0.5
  %v396 = vmul.f32 %v380, 0.5
  %v397 = vmul.f32 %v381, 0.5
  %v398 = vmul.f32 %v382, 0.5
  %v399 = vadd.f32 %v383, 0.5
  %v400 = vadd.f32 %v384, 0.5
  %v401 = vadd.f32 %v385, 0.5
  %v402 = vadd.f32 %v386, 0.5
  %v403 = vadd.f32 %v387, 0.5
  %v404 = vadd.f32 %v388, 0.5
  %v405 = vadd.f32 %v389, 0.5
  %v406 = vadd.f32 %v390, 0.5
  %v407 = vadd.f32 %v391, 0.5
  %v408 = vadd.f32 %v392, 0.5
  %v409 = vadd.f32 %v393, 0.5
  %v410 = vadd.f32 %v394, 0.5
  %v411 = vadd.f32 %v395, 0.5
  %v412 = vadd.f32 %v396, 0.5
  %v413 = vadd.f32 %v397, 0.5
  %v414 = vadd.f32 %v398, 0.5
  %v415 = vld [vmem:[%s3] sm:$0xff]
  %v416 = vld [vmem:[%s3 + $0x8] sm:$0xff]
  %v417 = vld [vmem:[%s3 + $0x10] sm:$0xff]
  %v418 = vld [vmem:[%s3 + $0x18] sm:$0xff]
  %v419 = vld [vmem:[%s3 + $0x20] sm:$0xff]
  %v420 = vld [vmem:[%s3 + $0x28] sm:$0xff]
  %v421 = vld [vmem:[%s3 + $0x30] sm:$0xff]
  %v422 = vld [vmem:[%s3 + $0x38] sm:$0xff]
  %v423 = vld [vmem:[%s3 + $0x40] sm:$0xff]
  %v424 = vld [vmem:[%s3 + $0x48] sm:$0xff]
  %v425 = vld [vmem:[%s3 + $0x50] sm:$0xff]
  %v426 = vld [vmem:[%s3 + $0x58] sm:$0xff]
  %v427 = vld [vmem:[%s3 + $0x60] sm:$0xff]
  %v428 = vld [vmem:[%s3 + $0x68] sm:$0xff]
  %v429 = vld [vmem:[%s3 + $0x70] sm:$0xff]
  %v430 = vld [vmem:[%s3 + $0x78] sm:$0xff]
  %v431 = vmul.f32 %v399, %v415
  %v432 = vmul.f32 %v400, %v416
  %v433 = vmul.f32 %v401, %v417
  %v434 = vmul.f32 %v402, %v418
  %v435 = vmul.f32 %v403, %v419
  %v436 = vmul.f32 %v404, %v420
  %v437 = vmul.f32 %v405, %v421
  %v438 = vmul.f32 %v406, %v422
  %v439 = vmul.f32 %v407, %v423
  %v440 = vmul.f32 %v408, %v424
  %v441 = vmul.f32 %v409, %v425
  %v442 = vmul.f32 %v410, %v426
  %v443 = vmul.f32 %v411, %v427
  %v444 = vmul.f32 %v412, %v428
  %v445 = vmul.f32 %v413, %v429
  %v446 = vmul.f32 %v414, %v430
  %447 = vmatprep.subr.mxu0 0.0
  %448 = vmatpush1.msra.mxu0 %v446
  %449 = vmatprep.subr.mxu0 0.0
  %450 = vmatpush1.msra.mxu0 %v445
  %451 = vmatprep.subr.mxu0 0.0
  %452 = vmatpush1.msra.mxu0 %v444
  %453 = vmatprep.subr.mxu0 0.0
  %454 = vmatpush1.msra.mxu0 %v443
  %455 = vmatprep.subr.mxu0 0.0
  %456 = vmatpush1.msra.mxu0 %v442
  %457 = vmatprep.subr.mxu0 0.0
  %458 = vmatpush1.msra.mxu0 %v441
  %459 = vmatprep.subr.mxu0 0.0
  %460 = vmatpush1.msra.mxu0 %v440
  %461 = vmatprep.subr.mxu0 0.0
  %462 = vmatpush1.msra.mxu0 %v439
  %463 = vmatprep.subr.mxu0 0.0
  %464 = vmatpush1.msra.mxu0 %v438
  %465 = vmatprep.subr.mxu0 0.0
  %466 = vmatpush1.msra.mxu0 %v437
  %467 = vmatprep.subr.mxu0 0.0
  %468 = vmatpush1.msra.mxu0 %v436
  %469 = vmatprep.subr.mxu0 0.0
  %470 = vmatpush1.msra.mxu0 %v435
  %471 = vmatprep.subr.mxu0 0.0
  %472 = vmatpush1.msra.mxu0 %v434
  %473 = vmatprep.subr.mxu0 0.0
  %474 = vmatpush1.msra.mxu0 %v433
  %475 = vmatprep.subr.mxu0 0.0
  %476 = vmatpush1.msra.mxu0 %v432
  %477 = vmatprep.subr.mxu0 0.0
  %478 = vmatpush1.msra.mxu0 %v431
  %479 = vmatprep.subr.mxu0 0.0
  %480 = vmatpush2.msra.mxu0 0.0
  %481 = vmatprep.subr.mxu0 0.0
  %482 = vmatpush2.msra.mxu0 0.0
  %483 = vmatprep.subr.mxu0 0.0
  %484 = vmatpush2.msra.mxu0 0.0
  %485 = vmatprep.subr.mxu0 0.0
  %486 = vmatpush2.msra.mxu0 0.0
  %487 = vmatprep.subr.mxu0 0.0
  %488 = vmatpush2.msra.mxu0 0.0
  %489 = vmatprep.subr.mxu0 0.0
  %490 = vmatpush2.msra.mxu0 0.0
  %491 = vmatprep.subr.mxu0 0.0
  %492 = vmatpush2.msra.mxu0 0.0
  %493 = vmatprep.subr.mxu0 0.0
  %494 = vmatpush2.msra.mxu0 0.0
  %495 = vmatprep.subr.mxu0 0.0
  %496 = vmatpush2.msra.mxu0 0.0
  %497 = vmatprep.subr.mxu0 0.0
  %498 = vmatpush2.msra.mxu0 0.0
  %499 = vmatprep.subr.mxu0 0.0
  %500 = vmatpush2.msra.mxu0 0.0
  %501 = vmatprep.subr.mxu0 0.0
  %502 = vmatpush2.msra.mxu0 0.0
  %503 = vmatprep.subr.mxu0 0.0
  %504 = vmatpush2.msra.mxu0 0.0
  %505 = vmatprep.subr.mxu0 0.0
  %506 = vmatpush2.msra.mxu0 0.0
  %507 = vmatprep.subr.mxu0 0.0
  %508 = vmatpush2.msra.mxu0 0.0
  %509 = vmatprep.subr.mxu0 0.0
  %510 = vmatpush2.msra.mxu0 0.0
  %511 = vmatprep.mubr.f32.mxu0 0.0
  %512 = vmatmul.mubr.f32.gmra.mxu0 %v116
  %v513 = vpop.f32.mrf.mxu0
  %v514 = vadd.f32 0.0, %v513
  %v515 = vpop.f32.mrf.mxu0
  %516 = vmatprep.mubr.f32.mxu0 0.0
  %517 = vmatmul.mubr.f32.gmra.mxu0 %v121
  %v518 = vpop.f32.mrf.mxu0
  %v519 = vadd.f32 0.0, %v518
  %v520 = vpop.f32.mrf.mxu0
  %521 = vdwg.mxu0
  %s522 = sld [smem:[#allocation2]]
  %v523 = vstv %s522
  %v524 = vmul.f32 %v523, %v514
  %v525 = vmul.f32 %v523, %v519
  %v526 = vadd.f32 %v524, %v21
  %v527 = vadd.f32 %v525, %v22
  %528 = vst [vmem:[%s5] sm:$0xff] %v526
  %529 = vst [vmem:[%s5 + $0x8] sm:$0xff] %v527
  // Predicated region
  $region22: #{self_attn_forward.1} parent=0 // pred_check
    _
  $region23: #{self_attn_forward.1} parent=0 // pred_check_branch
    %531 = sbr.rel (0) target = $region25
  $region24: #{self_attn_forward.1} parent=0 // pred_region
    _
  $region25: #{self_attn_forward.1} parent=0 // pred_fallthru
    _
  // Predicated region
  $region26: #{self_attn_forward.1} parent=0 // pred_check
    _
  $region27: #{self_attn_forward.1} parent=0 // pred_check_branch
    %533 = sbr.rel (0) target = $region29
  $region28: #{self_attn_forward.1} parent=0 // pred_region
    _
  $region29: #{self_attn_forward.1} parent=0 // pred_fallthru
    _

</llo_original>
